<compile_context>
chip_gen: v7x
topology: tpu7x:2x2x1
jax: 0.10.0
libtpu: 0.0.40
codegen_flags: <defaults>
</compile_context>

<pallas_src>
import functools

import jax
import jax.numpy as jnp
from jax.experimental import pallas as pl
from jax.experimental.pallas import tpu as pltpu


_LANE = 128
_VMEM_LIMIT_BYTES = 48 * 1024 * 1024  # safe on v5e/v6e (128 MiB) and v7x (64 MiB)


def _round_up(x, m):
    return (x + m - 1) // m * m


def _row_align(itemsize):
    # Sublane packing: f32 -> 8 rows/vreg, bf16 -> 16, int8/fp8 -> 32.
    return {4: 8, 2: 16, 1: 32}.get(itemsize, 8)


def _pool_rows_kernel(x_ref, o_ref, *, inv_hw):
    # Fast path: full H*W per block. x_ref: (tr, HW), o_ref: (tr, 1).
    x = x_ref[...].astype(jnp.float32)
    s = jnp.sum(x, axis=-1, keepdims=True) * inv_hw
    m = jnp.max(x, axis=-1, keepdims=True)
    o_ref[...] = ((s + m) * 0.5).astype(o_ref.dtype)


def _pool_rows_split_kernel(x_ref, o_ref, sum_acc, max_acc, *,
                            inv_hw, hw, thw, mask_needed):
    # Huge-HW path: H*W split across grid axis 1 (last, "arbitrary").
    # x_ref: (tr, thw); sum_acc/max_acc: (tr, 1) f32 scratch accumulators.
    j = pl.program_id(1)

    @pl.when(j == 0)
    def _():
        sum_acc[...] = jnp.zeros_like(sum_acc)
        max_acc[...] = jnp.full_like(max_acc, -jnp.inf)

    x = x_ref[...].astype(jnp.float32)
    if mask_needed:
        # Only the last HW block can be partial; exclude padded columns from
        # both the max and the sum (mean uses the true HW denominator).
        col = j * thw + jax.lax.broadcasted_iota(jnp.int32, x.shape, 1)
        valid = col < hw
        x_sum = jnp.where(valid, x, 0.0)
        x_max = jnp.where(valid, x, -jnp.inf)
    else:
        x_sum = x
        x_max = x

    sum_acc[...] += jnp.sum(x_sum, axis=-1, keepdims=True)
    max_acc[...] = jnp.maximum(max_acc[...],
                               jnp.max(x_max, axis=-1, keepdims=True))

    @pl.when(j == pl.num_programs(1) - 1)
    def _():
        o_ref[...] = ((sum_acc[...] * inv_hw + max_acc[...]) * 0.5).astype(o_ref.dtype)


def pooling_forward(x, *,
                    target_block_bytes=4 * 1024 * 1024,
                    max_block_bytes=8 * 1024 * 1024):
    """x: (N, C, H, W) -> (N, C, 1, 1), matching the PyTorch Pooling module."""
    N, C, H, W = x.shape
    R = N * C
    HW = H * W
    itemsize = jnp.dtype(x.dtype).itemsize
    align = _row_align(itemsize)
    x2d = x.reshape(R, HW)

    inv_hw = 1.0 / float(HW)
    row_bytes = HW * itemsize
    cost = pl.CostEstimate(flops=2 * R * HW, transcendentals=0,
                           bytes_accessed=R * HW * itemsize + R * itemsize)

    if row_bytes * align <= max_block_bytes:
        # --- Fast path: reduce a full row (all of H*W) per block. ---
        tr = max(align, (target_block_bytes // row_bytes) // align * align)
        tr = min(tr, _round_up(R, align))
        grid = (pl.cdiv(R, tr),)

        out2d = pl.pallas_call(
            functools.partial(_pool_rows_kernel, inv_hw=inv_hw),
            out_shape=jax.ShapeDtypeStruct((R, 1), x.dtype),
            grid_spec=pltpu.PrefetchScalarGridSpec(
                num_scalar_prefetch=0,
                grid=grid,
                in_specs=[pl.BlockSpec((tr, HW), lambda i: (i, 0))],
                out_specs=pl.BlockSpec((tr, 1), lambda i: (i, 0)),
            ),
            compiler_params=pltpu.CompilerParams(
                dimension_semantics=("parallel",),
                vmem_limit_bytes=_VMEM_LIMIT_BYTES,
            ),
            cost_estimate=cost,
        )(x2d)
    else:
        # --- Huge-HW path: split H*W over a trailing reduction axis. ---
        tr = align
        thw = max(_LANE, (target_block_bytes // (tr * itemsize)) // _LANE * _LANE)
        thw = min(thw, _round_up(HW, _LANE))
        grid = (pl.cdiv(R, tr), pl.cdiv(HW, thw))
        mask_needed = (HW % thw) != 0

        out2d = pl.pallas_call(
            functools.partial(_pool_rows_split_kernel, inv_hw=inv_hw, hw=HW,
                              thw=thw, mask_needed=mask_needed),
            out_shape=jax.ShapeDtypeStruct((R, 1), x.dtype),
            grid_spec=pltpu.PrefetchScalarGridSpec(
                num_scalar_prefetch=0,
                grid=grid,
                in_specs=[pl.BlockSpec((tr, thw), lambda i, j: (i, j))],
                out_specs=pl.BlockSpec((tr, 1), lambda i, j: (i, 0)),
                scratch_shapes=[pltpu.VMEM((tr, 1), jnp.float32),
                                pltpu.VMEM((tr, 1), jnp.float32)],
            ),
            compiler_params=pltpu.CompilerParams(
                dimension_semantics=("parallel", "arbitrary"),
                vmem_limit_bytes=_VMEM_LIMIT_BYTES,
            ),
            cost_estimate=cost,
        )(x2d)

    return out2d.reshape(N, C, 1, 1)


if __name__ == "__main__":
    key = jax.random.PRNGKey(0)
    k1, k2, k3 = jax.random.split(key, 3)

    def _ref(v):
        return 0.5 * (jnp.mean(v, axis=(2, 3), keepdims=True)
                      + jnp.max(v, axis=(2, 3), keepdims=True))

    # 1) Small NCHW input (single-pass row-tiled path).
    x1 = jax.random.normal(k1, (2, 4, 16, 16), dtype=jnp.float32)
    o1 = jax.block_until_ready(pooling_forward(x1))
    assert o1.shape == (2, 4, 1, 1)
    assert jnp.allclose(o1, _ref(x1), atol=1e-5, rtol=1e-5)

    # 2) R not a multiple of the row tile -> exercises cdiv grid / block padding.
    x2 = jax.random.normal(k2, (3, 5, 16, 16), dtype=jnp.float32)
    o2 = jax.block_until_ready(pooling_forward(x2))
    assert o2.shape == (3, 5, 1, 1)
    assert jnp.allclose(o2, _ref(x2), atol=1e-5, rtol=1e-5)

    # 3) Force the huge-HW accumulator path with tiny block budgets so both the
    #    partial-HW mask and the partial row block are exercised.
    x3 = jax.random.normal(k3, (3, 3, 32, 40), dtype=jnp.float32)
    o3 = jax.block_until_ready(
        pooling_forward(x3, target_block_bytes=16 * 1024, max_block_bytes=4 * 1024))
    assert o3.shape == (3, 3, 1, 1)
    assert jnp.allclose(o3, _ref(x3), atol=1e-5, rtol=1e-5)

    print("KERNEL_OK")
</pallas_src>

<mosaic_0001>
module attributes {stable_mosaic.version = 11 : i64} {
  func.func @_pool_rows_kernel(%arg0: i32, %arg1: memref<8x256xf32, #tpu.memory_space<vmem>>, %arg2: memref<8x1xf32, #tpu.memory_space<vmem>>) attributes {dimension_semantics = [#tpu.dimension_semantics<parallel>], iteration_bounds = array<i64: 1>, scalar_prefetch = 0 : i64, scratch_operands = 0 : i64, tpu.core_type = #tpu.core_type<tc>, window_params = [{transform_indices = @transform_0, window_bounds = array<i64: 8, 256>}, {transform_indices = @transform_1, window_bounds = array<i64: 8, 1>}]} {
    %c0 = arith.constant 0 : index
    %c0_0 = arith.constant 0 : index
    %0 = vector.load %arg1[%c0, %c0_0] : memref<8x256xf32, #tpu.memory_space<vmem>>, vector<8x256xf32>
    %cst = arith.constant dense<0.000000e+00> : vector<8xf32>
    %1 = vector.multi_reduction <add>, %0, %cst [1] : vector<8x256xf32> to vector<8xf32>
    %2 = vector.shape_cast %1 : vector<8xf32> to vector<8x1xf32>
    %cst_1 = arith.constant 3.906250e-03 : f32
    %3 = vector.broadcast %cst_1 : f32 to vector<8x1xf32>
    %4 = arith.mulf %2, %3 : vector<8x1xf32>
    %cst_2 = arith.constant dense<0xFF800000> : vector<8xf32>
    %5 = vector.multi_reduction <maximumf>, %0, %cst_2 [1] : vector<8x256xf32> to vector<8xf32>
    %6 = vector.shape_cast %5 : vector<8xf32> to vector<8x1xf32>
    %7 = arith.addf %4, %6 : vector<8x1xf32>
    %cst_3 = arith.constant 5.000000e-01 : f32
    %8 = vector.broadcast %cst_3 : f32 to vector<8x1xf32>
    %9 = arith.mulf %7, %8 : vector<8x1xf32>
    %c0_4 = arith.constant 0 : index
    %c0_5 = arith.constant 0 : index
    %10 = vector.load %arg2[%c0_4, %c0_5] : memref<8x1xf32, #tpu.memory_space<vmem>>, vector<8x1xf32>
    tpu.vector_store %arg2[%c0_4, %c0_5], %9 {strides = array<i32>} : memref<8x1xf32, #tpu.memory_space<vmem>>, vector<8x1xf32>,
    return
  }
  func.func @transform_0(%arg0: i32) -> (i32, i32) {
    %c0_i32 = arith.constant 0 : i32
    %c0_i32_0 = arith.constant 0 : i32
    return %arg0, %c0_i32 : i32, i32
  }
  func.func @transform_1(%arg0: i32) -> (i32, i32) {
    %c0_i32 = arith.constant 0 : i32
    %c0_i32_0 = arith.constant 0 : i32
    return %arg0, %c0_i32 : i32, i32
  }
}

</mosaic_0001>

<llo_original>
// kernel: tpu_custom_call.1
$region0: #{tpu_custom_call.1}
  #allocation0 [shape = 'u32[]', space=smem, size = 0x4, offset = 0x4, fixed_abs, tag = 'smem constant byte address 0x4 - core index']
  #allocation1 [shape = 'u32[144,128]{1,0:T(1,128)}', space=vmem, size = 0x12000, scoped, tag = 'internal scratch']
  %s0 = inlined_call_operand.hbm [shape: f32[8,256], index: 0, kind: input, shape index: {}]
  %s1 = inlined_call_operand.vmem [shape: f32[8,1], index: 1, kind: output, shape index: {}]
  %s2 = sld [smem:[#allocation0]]
  $region18: #{tpu_custom_call.1} parent=0
    _
  %s4 = ssub.s32 1, %s2
  %s5 = scalar_select 0, %s4, %s2
  $region1: #{tpu_custom_call.1} parent=0
    #allocation2 [shape = 'u8[8192]{0}', space=vmem, size = 0x2000, scoped, tag = 'input window, operand 0, single buffered']
    #allocation3 [shape = 's32[1]{0}', space=sflag, size = 0x4, scoped, tag = 'scoped memory for tpu_custom_call.1']
    %6 = vsyncpa [#allocation3], 0
    // Predicated region
    $region2: #{tpu_custom_call.1} parent=1 // pred_check
      _
    $region3: #{tpu_custom_call.1} parent=1 // pred_check_branch
      %8 = sbr.rel (0) target = $region5
    $region4: #{tpu_custom_call.1} parent=1 // pred_region
      %s10 = ssub.s32 256, 256
      %11 = vsyncadd [#allocation3], %s10
      %s13 = sshll.u32 [#allocation2], 4
      %s14 = int_to_ptr.vmem [resolvable:$true] %s13
      %16 = dma.hbm_to_vmem [thread:$0]  %s0, 256, %s14, [#allocation3]
    $region5: #{tpu_custom_call.1} parent=1 // pred_fallthru
      _
    // Predicated region
    $region6: #{tpu_custom_call.1} parent=1 // pred_check
      _
    $region7: #{tpu_custom_call.1} parent=1 // pred_check_branch
      %18 = sbr.rel (0) target = $region9
    $region8: #{tpu_custom_call.1} parent=1 // pred_region
      %19 = dma.done [#allocation3], 256
    $region9: #{tpu_custom_call.1} parent=1 // pred_fallthru
      _
    %v20 = vld [vmem:[#allocation2] sm:$0xff]
    %v21 = vld [vmem:[#allocation2 + $0x8] sm:$0xff]
    %v22 = vadd.f32 %v20, %v21
    %23 = vadd.xlane.f32.xlu0 %v22
    %v24 = vpop.xlane.xlu0 %23
    %v25 = vmul.f32 %v24, 0.00390625
    %v26 = vmax.f32 %v20, %v21
    %27 = vmax.xlane.f32.xlu0 %v26
    %v28 = vpop.xlane.xlu0 %27
    %v29 = vadd.f32 %v25, %v28
    %v30 = vmul.f32 %v29, 0.5
    %vm31 = vcmask 7168
    %32 = vst.msk [vmem:[%s1] sm:$0xff] %vm31, %v30
    // Predicated region
    $region10: #{tpu_custom_call.1} parent=1 // pred_check
      _
    $region11: #{tpu_custom_call.1} parent=1 // pred_check_branch
      %34 = sbr.rel (0) target = $region13
    $region12: #{tpu_custom_call.1} parent=1 // pred_region
      _
    $region13: #{tpu_custom_call.1} parent=1 // pred_fallthru
      _
    // Predicated region
    $region14: #{tpu_custom_call.1} parent=1 // pred_check
      _
    $region15: #{tpu_custom_call.1} parent=1 // pred_check_branch
      %36 = sbr.rel (0) target = $region17
    $region16: #{tpu_custom_call.1} parent=1 // pred_region
      _
    $region17: #{tpu_custom_call.1} parent=1 // pred_fallthru
      _
    %37 = vsyncpa [#allocation3], 1

</llo_original>
